<compile_context>
chip_gen: v7x
topology: tpu7x:2x2x1
jax: 0.10.0
libtpu: 0.0.40
codegen_flags: <defaults>
</compile_context>

<pallas_src>
import jax
import jax.numpy as jnp
from jax import lax
from jax.experimental import pallas as pl
from jax.experimental.pallas import tpu as pltpu


_UNROLL = 8                    # time steps per chunk (dense chunk load/store)
_SUB = 8                       # batch sublanes per step tile
_LANES = 128                   # batch lanes per step tile
_BATCH_TILE = _SUB * _LANES    # 1024 batch elements per grid batch tile


def gru_kernel(params_ref, len_ref, x_ref, out_ref, h_ref):
    """One (T_BLK, 8, 128) block of the GRU recurrence.

    params_ref: SMEM f32[12] = [w_ir, w_iz, w_in, w_hr, w_hz, w_hn,
                                b_ir, b_iz, b_in, b_hr, b_hz, b_hn]
    len_ref:    VMEM i32[8, 128]        sequence lengths (0 for padded lanes)
    x_ref:      VMEM f32[T_BLK, 8, 128] batch packed into sublanes x lanes
    out_ref:    VMEM f32[T_BLK, 8, 128]
    h_ref:      VMEM f32[8, 128]        hidden state carried across time blocks
    """
    t_blk = x_ref.shape[0]
    j = pl.program_id(1)  # time-block index (innermost, "arbitrary")

    # New batch tile -> reset hidden state.
    @pl.when(j == 0)
    def _init():
        h_ref[...] = jnp.zeros_like(h_ref)

    # Hoist scalar->vreg splats out of the recurrence (JAX does not CSE
    # broadcast_in_dim) and fold the r/z bias pairs.
    def splat(s):
        return jnp.full((_SUB, _LANES), s, dtype=jnp.float32)

    w_ir = splat(params_ref[0])
    w_iz = splat(params_ref[1])
    w_in = splat(params_ref[2])
    w_hr = splat(params_ref[3])
    w_hz = splat(params_ref[4])
    w_hn = splat(params_ref[5])
    b_r = splat(params_ref[6] + params_ref[9])     # b_ir + b_hr
    b_z = splat(params_ref[7] + params_ref[10])    # b_iz + b_hz
    b_ni = splat(params_ref[8])                    # b_in
    b_nh = splat(params_ref[11])                   # b_hn

    lens = len_ref[...]                 # (8, 128) int32
    t_base = j * t_blk                  # global time offset of this block

    def chunk_body(c, h):
        base = pl.multiple_of(c * _UNROLL, _UNROLL)
        x_chunk = x_ref[pl.ds(base, _UNROLL), :, :]     # dense (8, 8, 128) load
        outs = []
        for k in range(_UNROLL):                        # 8 dependent GRU steps
            x_k = x_chunk[k]                            # (8, 128): 1024 chains
            # x-affine terms do not depend on h -> off the dependent chain.
            a_r = w_ir * x_k + b_r
            a_z = w_iz * x_k + b_z
            a_n = w_in * x_k + b_ni
            hn = w_hn * h + b_nh
            # Two independent EUP pushes (r first: it gates the tanh path).
            r = jax.nn.sigmoid(w_hr * h + a_r)
            z = jax.nn.sigmoid(w_hz * h + a_z)
            n = jnp.tanh(a_n + r * hn)
            h = n + z * (h - n)                         # == (1 - z)*n + z*h
            # pad_packed_sequence semantics: padded positions emit 0. h is NOT
            # frozen: validity (t < len) is monotone in t, so h at invalid
            # steps is never observed in any emitted output.
            valid = (t_base + base + k) < lens
            outs.append(jnp.where(valid, h, 0.0))
        # One aligned, lane/sublane-dense store per chunk.
        out_ref[pl.ds(base, _UNROLL), :, :] = jnp.stack(outs, axis=0)
        return h

    h_ref[...] = lax.fori_loop(0, t_blk // _UNROLL, chunk_body, h_ref[...])


def _round_up(v, m):
    return (v + m - 1) // m * m


def simple_rnn_forward(x, lengths, params, *, max_t_blk=512):
    """x: (B, T, 1) f32, lengths: (B,) int, params: (12,) f32 -> (B, T, 1) f32."""
    B, T, I = x.shape
    assert I == 1, "SimpleRNN was built with input_size=1"

    t_blk = min(max_t_blk, _round_up(T, _UNROLL))       # multiple of the unroll
    T_pad = _round_up(T, t_blk)
    B_pad = _round_up(B, _BATCH_TILE)
    n_btiles = B_pad // _BATCH_TILE

    # Pack batch into (tile, sublane, lane) = (B//1024, 8, 128) so every
    # per-step VPU/EUP op works on full vregs; time is the leading block axis.
    # TODO(synk): fuse this pack/transpose into the kernel (B-major BlockSpec +
    # in-kernel XLU transpose) once B*T is large enough for the extra HBM
    # round trip to matter.
    x_bt = jnp.pad(x[..., 0].astype(jnp.float32),
                   ((0, B_pad - B), (0, T_pad - T)))                 # (B_pad, T_pad)
    x_pack = jnp.transpose(
        x_bt.reshape(n_btiles, _SUB, _LANES, T_pad), (0, 3, 1, 2))   # (nb, T, 8, 128)
    # Padded batch lanes get length 0 so they only ever emit the padding value.
    lens = jnp.pad(lengths.astype(jnp.int32), (0, B_pad - B))
    lens_pack = lens.reshape(n_btiles, _SUB, _LANES)

    grid = (n_btiles, T_pad // t_blk)

    out_pack = pl.pallas_call(
        gru_kernel,
        out_shape=jax.ShapeDtypeStruct((n_btiles, T_pad, _SUB, _LANES), jnp.float32),
        grid=grid,
        in_specs=[
            pl.BlockSpec((12,), lambda i, j: (0,),
                         memory_space=pltpu.MemorySpace.SMEM),            # params
            pl.BlockSpec((None, _SUB, _LANES), lambda i, j: (i, 0, 0)),   # lengths
            pl.BlockSpec((None, t_blk, _SUB, _LANES),
                         lambda i, j: (i, j, 0, 0)),                      # x
        ],
        out_specs=pl.BlockSpec((None, t_blk, _SUB, _LANES),
                               lambda i, j: (i, j, 0, 0)),
        scratch_shapes=[pltpu.VMEM((_SUB, _LANES), jnp.float32)],         # hidden h
        compiler_params=pltpu.CompilerParams(
            dimension_semantics=("parallel", "arbitrary")),
    )(params.astype(jnp.float32), lens_pack, x_pack)

    out_bt = jnp.transpose(out_pack, (0, 2, 3, 1)).reshape(B_pad, T_pad)
    return out_bt[:B, :T][..., None]                                      # (B, T, 1)


def gru_reference(x, lengths, params):
    """Pure-JAX reference of the same GRU + pad_packed semantics."""
    w_ir, w_iz, w_in, w_hr, w_hz, w_hn, b_ir, b_iz, b_in, b_hr, b_hz, b_hn = [
        params[i] for i in range(12)
    ]
    B, T, _ = x.shape
    h = jnp.zeros((B,), jnp.float32)
    outs = []
    for t in range(T):
        x_t = x[:, t, 0]
        r = jax.nn.sigmoid(w_ir * x_t + b_ir + w_hr * h + b_hr)
        z = jax.nn.sigmoid(w_iz * x_t + b_iz + w_hz * h + b_hz)
        n = jnp.tanh(w_in * x_t + b_in + r * (w_hn * h + b_hn))
        h_new = (1.0 - z) * n + z * h
        valid = t < lengths
        h = jnp.where(valid, h_new, h)
        outs.append(jnp.where(valid, h, 0.0))
    return jnp.stack(outs, axis=1)[..., None]  # (B, T, 1)


if __name__ == "__main__":
    key = jax.random.PRNGKey(0)
    k_x1, k_x2, k_p = jax.random.split(key, 3)

    # PyTorch GRU init: U(-1/sqrt(hidden), 1/sqrt(hidden)) = U(-1, 1) for hidden=1.
    params = jax.random.uniform(k_p, (12,), dtype=jnp.float32, minval=-1.0, maxval=1.0)

    # Case 1: toy spec shape (B=2, T=8), variable lengths (packed sequence).
    B, T = 2, 8
    x = jax.random.normal(k_x1, (B, T, 1), dtype=jnp.float32)
    lengths = jnp.array([T, 5], dtype=jnp.int32)
    out = jax.block_until_ready(simple_rnn_forward(x, lengths, params))
    ref = gru_reference(x, lengths, params)
    assert out.shape == (B, T, 1)
    assert jnp.allclose(out, ref, atol=1e-5, rtol=1e-5), "case1 mismatch vs reference"

    # Case 2: exercises time padding (13 -> 16) and batch padding (3 -> 1024 tile).
    B2, T2 = 3, 13
    x2 = jax.random.normal(k_x2, (B2, T2, 1), dtype=jnp.float32)
    lengths2 = jnp.array([13, 7, 1], dtype=jnp.int32)
    out2 = jax.block_until_ready(simple_rnn_forward(x2, lengths2, params))
    ref2 = gru_reference(x2, lengths2, params)
    assert out2.shape == (B2, T2, 1)
    assert jnp.allclose(out2, ref2, atol=1e-5, rtol=1e-5), "case2 mismatch vs reference"

    print("KERNEL_OK")
</pallas_src>

<mosaic_0001>
module attributes {stable_mosaic.version = 11 : i64} {
  func.func @gru_kernel(%arg0: i32, %arg1: i32, %arg2: memref<12xf32, #tpu.memory_space<smem>>, %arg3: memref<1x8x128xi32, #tpu.memory_space<vmem>>, %arg4: memref<1x8x8x128xf32, #tpu.memory_space<vmem>>, %arg5: memref<1x8x8x128xf32, #tpu.memory_space<vmem>>, %arg6: memref<8x128xf32, #tpu.memory_space<vmem>>) attributes {dimension_semantics = [#tpu.dimension_semantics<parallel>, #tpu.dimension_semantics<arbitrary>], iteration_bounds = array<i64: 1, 1>, scalar_prefetch = 0 : i64, scratch_operands = 1 : i64, tpu.core_type = #tpu.core_type<tc>, window_params = [{transform_indices = @transform_0, window_bounds = array<i64: 12>}, {transform_indices = @transform_1, window_bounds = array<i64: 1, 8, 128>}, {transform_indices = @transform_2, window_bounds = array<i64: 1, 8, 8, 128>}, {transform_indices = @transform_3, window_bounds = array<i64: 1, 8, 8, 128>}]} {
    %c0_i32 = arith.constant 0 : i32
    %0 = arith.cmpi eq, %arg1, %c0_i32 : i32
    %1 = arith.extui %0 : i1 to i32
    %c0_i32_0 = arith.constant 0 : i32
    %2 = arith.cmpi ne, %1, %c0_i32_0 : i32
    scf.if %2 {
      %cst_41 = arith.constant 0.000000e+00 : f32
      %338 = vector.broadcast %cst_41 : f32 to vector<8x128xf32>
      %c0_42 = arith.constant 0 : index
      %c0_43 = arith.constant 0 : index
      %339 = vector.load %arg6[%c0_42, %c0_43] : memref<8x128xf32, #tpu.memory_space<vmem>>, vector<8x128xf32>
      tpu.vector_store %arg6[%c0_42, %c0_43], %338 {strides = array<i32>} : memref<8x128xf32, #tpu.memory_space<vmem>>, vector<8x128xf32>,
    } else {
    }
    %c0 = arith.constant 0 : index
    %3 = memref.load %arg2[%c0] : memref<12xf32, #tpu.memory_space<smem>>
    %4 = vector.broadcast %3 : f32 to vector<8x128xf32>
    %c1 = arith.constant 1 : index
    %5 = memref.load %arg2[%c1] : memref<12xf32, #tpu.memory_space<smem>>
    %6 = vector.broadcast %5 : f32 to vector<8x128xf32>
    %c2 = arith.constant 2 : index
    %7 = memref.load %arg2[%c2] : memref<12xf32, #tpu.memory_space<smem>>
    %8 = vector.broadcast %7 : f32 to vector<8x128xf32>
    %c3 = arith.constant 3 : index
    %9 = memref.load %arg2[%c3] : memref<12xf32, #tpu.memory_space<smem>>
    %10 = vector.broadcast %9 : f32 to vector<8x128xf32>
    %c4 = arith.constant 4 : index
    %11 = memref.load %arg2[%c4] : memref<12xf32, #tpu.memory_space<smem>>
    %12 = vector.broadcast %11 : f32 to vector<8x128xf32>
    %c5 = arith.constant 5 : index
    %13 = memref.load %arg2[%c5] : memref<12xf32, #tpu.memory_space<smem>>
    %14 = vector.broadcast %13 : f32 to vector<8x128xf32>
    %c6 = arith.constant 6 : index
    %15 = memref.load %arg2[%c6] : memref<12xf32, #tpu.memory_space<smem>>
    %c9 = arith.constant 9 : index
    %16 = memref.load %arg2[%c9] : memref<12xf32, #tpu.memory_space<smem>>
    %17 = arith.addf %15, %16 : f32
    %18 = vector.broadcast %17 : f32 to vector<8x128xf32>
    %c7 = arith.constant 7 : index
    %19 = memref.load %arg2[%c7] : memref<12xf32, #tpu.memory_space<smem>>
    %c10 = arith.constant 10 : index
    %20 = memref.load %arg2[%c10] : memref<12xf32, #tpu.memory_space<smem>>
    %21 = arith.addf %19, %20 : f32
    %22 = vector.broadcast %21 : f32 to vector<8x128xf32>
    %c8 = arith.constant 8 : index
    %23 = memref.load %arg2[%c8] : memref<12xf32, #tpu.memory_space<smem>>
    %24 = vector.broadcast %23 : f32 to vector<8x128xf32>
    %c11 = arith.constant 11 : index
    %25 = memref.load %arg2[%c11] : memref<12xf32, #tpu.memory_space<smem>>
    %26 = vector.broadcast %25 : f32 to vector<8x128xf32>
    %c0_1 = arith.constant 0 : index
    %c0_2 = arith.constant 0 : index
    %c0_3 = arith.constant 0 : index
    %27 = vector.load %arg3[%c0_1, %c0_2, %c0_3] : memref<1x8x128xi32, #tpu.memory_space<vmem>>, vector<1x8x128xi32>
    %28 = vector.shape_cast %27 : vector<1x8x128xi32> to vector<8x128xi32>
    %c8_i32 = arith.constant 8 : i32
    %29 = arith.muli %arg1, %c8_i32 : i32
    %c0_4 = arith.constant 0 : index
    %c0_5 = arith.constant 0 : index
    %30 = vector.load %arg6[%c0_4, %c0_5] : memref<8x128xf32, #tpu.memory_space<vmem>>, vector<8x128xf32>
    %c0_i32_6 = arith.constant 0 : i32
    %c8_i32_7 = arith.constant 8 : i32
    %31 = arith.muli %c0_i32_6, %c8_i32_7 : i32
    %32 = tpu.assume_multiple %31, 8 : i32
    %c0_8 = arith.constant 0 : index
    %33 = arith.index_cast %32 : i32 to index
    %c0_9 = arith.constant 0 : index
    %c0_10 = arith.constant 0 : index
    %34 = vector.load %arg4[%c0_8, %33, %c0_9, %c0_10] : memref<1x8x8x128xf32, #tpu.memory_space<vmem>>, vector<1x8x8x128xf32>
    %35 = vector.shape_cast %34 : vector<1x8x8x128xf32> to vector<8x8x128xf32>
    %36 = vector.extract_strided_slice %35 {offsets = [0, 0, 0], sizes = [1, 8, 128], strides = [1, 1, 1]} : vector<8x8x128xf32> to vector<1x8x128xf32>
    %37 = vector.shape_cast %36 : vector<1x8x128xf32> to vector<8x128xf32>
    %38 = arith.mulf %4, %37 : vector<8x128xf32>
    %39 = arith.addf %38, %18 : vector<8x128xf32>
    %40 = arith.mulf %6, %37 : vector<8x128xf32>
    %41 = arith.addf %40, %22 : vector<8x128xf32>
    %42 = arith.mulf %8, %37 : vector<8x128xf32>
    %43 = arith.addf %42, %24 : vector<8x128xf32>
    %44 = arith.mulf %14, %30 : vector<8x128xf32>
    %45 = arith.addf %44, %26 : vector<8x128xf32>
    %46 = arith.mulf %10, %30 : vector<8x128xf32>
    %47 = arith.addf %46, %39 : vector<8x128xf32>
    %48 = arith.negf %47 : vector<8x128xf32>
    %49 = math.exp %48 : vector<8x128xf32>
    %cst = arith.constant 1.000000e+00 : f32
    %50 = vector.broadcast %cst : f32 to vector<8x128xf32>
    %51 = arith.addf %50, %49 : vector<8x128xf32>
    %52 = arith.divf %50, %51 : vector<8x128xf32>
    %53 = arith.mulf %12, %30 : vector<8x128xf32>
    %54 = arith.addf %53, %41 : vector<8x128xf32>
    %55 = arith.negf %54 : vector<8x128xf32>
    %56 = math.exp %55 : vector<8x128xf32>
    %cst_11 = arith.constant 1.000000e+00 : f32
    %57 = vector.broadcast %cst_11 : f32 to vector<8x128xf32>
    %58 = arith.addf %57, %56 : vector<8x128xf32>
    %59 = arith.divf %57, %58 : vector<8x128xf32>
    %60 = arith.mulf %52, %45 : vector<8x128xf32>
    %61 = arith.addf %43, %60 : vector<8x128xf32>
    %62 = math.tanh %61 : vector<8x128xf32>
    %63 = arith.subf %30, %62 : vector<8x128xf32>
    %64 = arith.mulf %59, %63 : vector<8x128xf32>
    %65 = arith.addf %62, %64 : vector<8x128xf32>
    %66 = arith.addi %29, %32 : i32
    %c0_i32_12 = arith.constant 0 : i32
    %67 = arith.addi %66, %c0_i32_12 : i32
    %68 = vector.broadcast %67 : i32 to vector<8x128xi32>
    %69 = arith.cmpi slt, %68, %28 : vector<8x128xi32>
    %cst_13 = arith.constant 0.000000e+00 : f32
    %70 = vector.broadcast %cst_13 : f32 to vector<8x128xf32>
    %71 = arith.select %69, %65, %70 : vector<8x128xi1>, vector<8x128xf32>
    %72 = vector.extract_strided_slice %35 {offsets = [1, 0, 0], sizes = [1, 8, 128], strides = [1, 1, 1]} : vector<8x8x128xf32> to vector<1x8x128xf32>
    %73 = vector.shape_cast %72 : vector<1x8x128xf32> to vector<8x128xf32>
    %74 = arith.mulf %4, %73 : vector<8x128xf32>
    %75 = arith.addf %74, %18 : vector<8x128xf32>
    %76 = arith.mulf %6, %73 : vector<8x128xf32>
    %77 = arith.addf %76, %22 : vector<8x128xf32>
    %78 = arith.mulf %8, %73 : vector<8x128xf32>
    %79 = arith.addf %78, %24 : vector<8x128xf32>
    %80 = arith.mulf %14, %65 : vector<8x128xf32>
    %81 = arith.addf %80, %26 : vector<8x128xf32>
    %82 = arith.mulf %10, %65 : vector<8x128xf32>
    %83 = arith.addf %82, %75 : vector<8x128xf32>
    %84 = arith.negf %83 : vector<8x128xf32>
    %85 = math.exp %84 : vector<8x128xf32>
    %cst_14 = arith.constant 1.000000e+00 : f32
    %86 = vector.broadcast %cst_14 : f32 to vector<8x128xf32>
    %87 = arith.addf %86, %85 : vector<8x128xf32>
    %88 = arith.divf %86, %87 : vector<8x128xf32>
    %89 = arith.mulf %12, %65 : vector<8x128xf32>
    %90 = arith.addf %89, %77 : vector<8x128xf32>
    %91 = arith.negf %90 : vector<8x128xf32>
    %92 = math.exp %91 : vector<8x128xf32>
    %cst_15 = arith.constant 1.000000e+00 : f32
    %93 = vector.broadcast %cst_15 : f32 to vector<8x128xf32>
    %94 = arith.addf %93, %92 : vector<8x128xf32>
    %95 = arith.divf %93, %94 : vector<8x128xf32>
    %96 = arith.mulf %88, %81 : vector<8x128xf32>
    %97 = arith.addf %79, %96 : vector<8x128xf32>
    %98 = math.tanh %97 : vector<8x128xf32>
    %99 = arith.subf %65, %98 : vector<8x128xf32>
    %100 = arith.mulf %95, %99 : vector<8x128xf32>
    %101 = arith.addf %98, %100 : vector<8x128xf32>
    %102 = arith.addi %29, %32 : i32
    %c1_i32 = arith.constant 1 : i32
    %103 = arith.addi %102, %c1_i32 : i32
    %104 = vector.broadcast %103 : i32 to vector<8x128xi32>
    %105 = arith.cmpi slt, %104, %28 : vector<8x128xi32>
    %cst_16 = arith.constant 0.000000e+00 : f32
    %106 = vector.broadcast %cst_16 : f32 to vector<8x128xf32>
    %107 = arith.select %105, %101, %106 : vector<8x128xi1>, vector<8x128xf32>
    %108 = vector.extract_strided_slice %35 {offsets = [2, 0, 0], sizes = [1, 8, 128], strides = [1, 1, 1]} : vector<8x8x128xf32> to vector<1x8x128xf32>
    %109 = vector.shape_cast %108 : vector<1x8x128xf32> to vector<8x128xf32>
    %110 = arith.mulf %4, %109 : vector<8x128xf32>
    %111 = arith.addf %110, %18 : vector<8x128xf32>
    %112 = arith.mulf %6, %109 : vector<8x128xf32>
    %113 = arith.addf %112, %22 : vector<8x128xf32>
    %114 = arith.mulf %8, %109 : vector<8x128xf32>
    %115 = arith.addf %114, %24 : vector<8x128xf32>
    %116 = arith.mulf %14, %101 : vector<8x128xf32>
    %117 = arith.addf %116, %26 : vector<8x128xf32>
    %118 = arith.mulf %10, %101 : vector<8x128xf32>
    %119 = arith.addf %118, %111 : vector<8x128xf32>
    %120 = arith.negf %119 : vector<8x128xf32>
    %121 = math.exp %120 : vector<8x128xf32>
    %cst_17 = arith.constant 1.000000e+00 : f32
    %122 = vector.broadcast %cst_17 : f32 to vector<8x128xf32>
    %123 = arith.addf %122, %121 : vector<8x128xf32>
    %124 = arith.divf %122, %123 : vector<8x128xf32>
    %125 = arith.mulf %12, %101 : vector<8x128xf32>
    %126 = arith.addf %125, %113 : vector<8x128xf32>
    %127 = arith.negf %126 : vector<8x128xf32>
    %128 = math.exp %127 : vector<8x128xf32>
    %cst_18 = arith.constant 1.000000e+00 : f32
    %129 = vector.broadcast %cst_18 : f32 to vector<8x128xf32>
    %130 = arith.addf %129, %128 : vector<8x128xf32>
    %131 = arith.divf %129, %130 : vector<8x128xf32>
    %132 = arith.mulf %124, %117 : vector<8x128xf32>
    %133 = arith.addf %115, %132 : vector<8x128xf32>
    %134 = math.tanh %133 : vector<8x128xf32>
    %135 = arith.subf %101, %134 : vector<8x128xf32>
    %136 = arith.mulf %131, %135 : vector<8x128xf32>
    %137 = arith.addf %134, %136 : vector<8x128xf32>
    %138 = arith.addi %29, %32 : i32
    %c2_i32 = arith.constant 2 : i32
    %139 = arith.addi %138, %c2_i32 : i32
    %140 = vector.broadcast %139 : i32 to vector<8x128xi32>
    %141 = arith.cmpi slt, %140, %28 : vector<8x128xi32>
    %cst_19 = arith.constant 0.000000e+00 : f32
    %142 = vector.broadcast %cst_19 : f32 to vector<8x128xf32>
    %143 = arith.select %141, %137, %142 : vector<8x128xi1>, vector<8x128xf32>
    %144 = vector.extract_strided_slice %35 {offsets = [3, 0, 0], sizes = [1, 8, 128], strides = [1, 1, 1]} : vector<8x8x128xf32> to vector<1x8x128xf32>
    %145 = vector.shape_cast %144 : vector<1x8x128xf32> to vector<8x128xf32>
    %146 = arith.mulf %4, %145 : vector<8x128xf32>
    %147 = arith.addf %146, %18 : vector<8x128xf32>
    %148 = arith.mulf %6, %145 : vector<8x128xf32>
    %149 = arith.addf %148, %22 : vector<8x128xf32>
    %150 = arith.mulf %8, %145 : vector<8x128xf32>
    %151 = arith.addf %150, %24 : vector<8x128xf32>
    %152 = arith.mulf %14, %137 : vector<8x128xf32>
    %153 = arith.addf %152, %26 : vector<8x128xf32>
    %154 = arith.mulf %10, %137 : vector<8x128xf32>
    %155 = arith.addf %154, %147 : vector<8x128xf32>
    %156 = arith.negf %155 : vector<8x128xf32>
    %157 = math.exp %156 : vector<8x128xf32>
    %cst_20 = arith.constant 1.000000e+00 : f32
    %158 = vector.broadcast %cst_20 : f32 to vector<8x128xf32>
    %159 = arith.addf %158, %157 : vector<8x128xf32>
    %160 = arith.divf %158, %159 : vector<8x128xf32>
    %161 = arith.mulf %12, %137 : vector<8x128xf32>
    %162 = arith.addf %161, %149 : vector<8x128xf32>
    %163 = arith.negf %162 : vector<8x128xf32>
    %164 = math.exp %163 : vector<8x128xf32>
    %cst_21 = arith.constant 1.000000e+00 : f32
    %165 = vector.broadcast %cst_21 : f32 to vector<8x128xf32>
    %166 = arith.addf %165, %164 : vector<8x128xf32>
    %167 = arith.divf %165, %166 : vector<8x128xf32>
    %168 = arith.mulf %160, %153 : vector<8x128xf32>
    %169 = arith.addf %151, %168 : vector<8x128xf32>
    %170 = math.tanh %169 : vector<8x128xf32>
    %171 = arith.subf %137, %170 : vector<8x128xf32>
    %172 = arith.mulf %167, %171 : vector<8x128xf32>
    %173 = arith.addf %170, %172 : vector<8x128xf32>
    %174 = arith.addi %29, %32 : i32
    %c3_i32 = arith.constant 3 : i32
    %175 = arith.addi %174, %c3_i32 : i32
    %176 = vector.broadcast %175 : i32 to vector<8x128xi32>
    %177 = arith.cmpi slt, %176, %28 : vector<8x128xi32>
    %cst_22 = arith.constant 0.000000e+00 : f32
    %178 = vector.broadcast %cst_22 : f32 to vector<8x128xf32>
    %179 = arith.select %177, %173, %178 : vector<8x128xi1>, vector<8x128xf32>
    %180 = vector.extract_strided_slice %35 {offsets = [4, 0, 0], sizes = [1, 8, 128], strides = [1, 1, 1]} : vector<8x8x128xf32> to vector<1x8x128xf32>
    %181 = vector.shape_cast %180 : vector<1x8x128xf32> to vector<8x128xf32>
    %182 = arith.mulf %4, %181 : vector<8x128xf32>
    %183 = arith.addf %182, %18 : vector<8x128xf32>
    %184 = arith.mulf %6, %181 : vector<8x128xf32>
    %185 = arith.addf %184, %22 : vector<8x128xf32>
    %186 = arith.mulf %8, %181 : vector<8x128xf32>
    %187 = arith.addf %186, %24 : vector<8x128xf32>
    %188 = arith.mulf %14, %173 : vector<8x128xf32>
    %189 = arith.addf %188, %26 : vector<8x128xf32>
    %190 = arith.mulf %10, %173 : vector<8x128xf32>
    %191 = arith.addf %190, %183 : vector<8x128xf32>
    %192 = arith.negf %191 : vector<8x128xf32>
    %193 = math.exp %192 : vector<8x128xf32>
    %cst_23 = arith.constant 1.000000e+00 : f32
    %194 = vector.broadcast %cst_23 : f32 to vector<8x128xf32>
    %195 = arith.addf %194, %193 : vector<8x128xf32>
    %196 = arith.divf %194, %195 : vector<8x128xf32>
    %197 = arith.mulf %12, %173 : vector<8x128xf32>
    %198 = arith.addf %197, %185 : vector<8x128xf32>
    %199 = arith.negf %198 : vector<8x128xf32>
    %200 = math.exp %199 : vector<8x128xf32>
    %cst_24 = arith.constant 1.000000e+00 : f32
    %201 = vector.broadcast %cst_24 : f32 to vector<8x128xf32>
    %202 = arith.addf %201, %200 : vector<8x128xf32>
    %203 = arith.divf %201, %202 : vector<8x128xf32>
    %204 = arith.mulf %196, %189 : vector<8x128xf32>
    %205 = arith.addf %187, %204 : vector<8x128xf32>
    %206 = math.tanh %205 : vector<8x128xf32>
    %207 = arith.subf %173, %206 : vector<8x128xf32>
    %208 = arith.mulf %203, %207 : vector<8x128xf32>
    %209 = arith.addf %206, %208 : vector<8x128xf32>
    %210 = arith.addi %29, %32 : i32
    %c4_i32 = arith.constant 4 : i32
    %211 = arith.addi %210, %c4_i32 : i32
    %212 = vector.broadcast %211 : i32 to vector<8x128xi32>
    %213 = arith.cmpi slt, %212, %28 : vector<8x128xi32>
    %cst_25 = arith.constant 0.000000e+00 : f32
    %214 = vector.broadcast %cst_25 : f32 to vector<8x128xf32>
    %215 = arith.select %213, %209, %214 : vector<8x128xi1>, vector<8x128xf32>
    %216 = vector.extract_strided_slice %35 {offsets = [5, 0, 0], sizes = [1, 8, 128], strides = [1, 1, 1]} : vector<8x8x128xf32> to vector<1x8x128xf32>
    %217 = vector.shape_cast %216 : vector<1x8x128xf32> to vector<8x128xf32>
    %218 = arith.mulf %4, %217 : vector<8x128xf32>
    %219 = arith.addf %218, %18 : vector<8x128xf32>
    %220 = arith.mulf %6, %217 : vector<8x128xf32>
    %221 = arith.addf %220, %22 : vector<8x128xf32>
    %222 = arith.mulf %8, %217 : vector<8x128xf32>
    %223 = arith.addf %222, %24 : vector<8x128xf32>
    %224 = arith.mulf %14, %209 : vector<8x128xf32>
    %225 = arith.addf %224, %26 : vector<8x128xf32>
    %226 = arith.mulf %10, %209 : vector<8x128xf32>
    %227 = arith.addf %226, %219 : vector<8x128xf32>
    %228 = arith.negf %227 : vector<8x128xf32>
    %229 = math.exp %228 : vector<8x128xf32>
    %cst_26 = arith.constant 1.000000e+00 : f32
    %230 = vector.broadcast %cst_26 : f32 to vector<8x128xf32>
    %231 = arith.addf %230, %229 : vector<8x128xf32>
    %232 = arith.divf %230, %231 : vector<8x128xf32>
    %233 = arith.mulf %12, %209 : vector<8x128xf32>
    %234 = arith.addf %233, %221 : vector<8x128xf32>
    %235 = arith.negf %234 : vector<8x128xf32>
    %236 = math.exp %235 : vector<8x128xf32>
    %cst_27 = arith.constant 1.000000e+00 : f32
    %237 = vector.broadcast %cst_27 : f32 to vector<8x128xf32>
    %238 = arith.addf %237, %236 : vector<8x128xf32>
    %239 = arith.divf %237, %238 : vector<8x128xf32>
    %240 = arith.mulf %232, %225 : vector<8x128xf32>
    %241 = arith.addf %223, %240 : vector<8x128xf32>
    %242 = math.tanh %241 : vector<8x128xf32>
    %243 = arith.subf %209, %242 : vector<8x128xf32>
    %244 = arith.mulf %239, %243 : vector<8x128xf32>
    %245 = arith.addf %242, %244 : vector<8x128xf32>
    %246 = arith.addi %29, %32 : i32
    %c5_i32 = arith.constant 5 : i32
    %247 = arith.addi %246, %c5_i32 : i32
    %248 = vector.broadcast %247 : i32 to vector<8x128xi32>
    %249 = arith.cmpi slt, %248, %28 : vector<8x128xi32>
    %cst_28 = arith.constant 0.000000e+00 : f32
    %250 = vector.broadcast %cst_28 : f32 to vector<8x128xf32>
    %251 = arith.select %249, %245, %250 : vector<8x128xi1>, vector<8x128xf32>
    %252 = vector.extract_strided_slice %35 {offsets = [6, 0, 0], sizes = [1, 8, 128], strides = [1, 1, 1]} : vector<8x8x128xf32> to vector<1x8x128xf32>
    %253 = vector.shape_cast %252 : vector<1x8x128xf32> to vector<8x128xf32>
    %254 = arith.mulf %4, %253 : vector<8x128xf32>
    %255 = arith.addf %254, %18 : vector<8x128xf32>
    %256 = arith.mulf %6, %253 : vector<8x128xf32>
    %257 = arith.addf %256, %22 : vector<8x128xf32>
    %258 = arith.mulf %8, %253 : vector<8x128xf32>
    %259 = arith.addf %258, %24 : vector<8x128xf32>
    %260 = arith.mulf %14, %245 : vector<8x128xf32>
    %261 = arith.addf %260, %26 : vector<8x128xf32>
    %262 = arith.mulf %10, %245 : vector<8x128xf32>
    %263 = arith.addf %262, %255 : vector<8x128xf32>
    %264 = arith.negf %263 : vector<8x128xf32>
    %265 = math.exp %264 : vector<8x128xf32>
    %cst_29 = arith.constant 1.000000e+00 : f32
    %266 = vector.broadcast %cst_29 : f32 to vector<8x128xf32>
    %267 = arith.addf %266, %265 : vector<8x128xf32>
    %268 = arith.divf %266, %267 : vector<8x128xf32>
    %269 = arith.mulf %12, %245 : vector<8x128xf32>
    %270 = arith.addf %269, %257 : vector<8x128xf32>
    %271 = arith.negf %270 : vector<8x128xf32>
    %272 = math.exp %271 : vector<8x128xf32>
    %cst_30 = arith.constant 1.000000e+00 : f32
    %273 = vector.broadcast %cst_30 : f32 to vector<8x128xf32>
    %274 = arith.addf %273, %272 : vector<8x128xf32>
    %275 = arith.divf %273, %274 : vector<8x128xf32>
    %276 = arith.mulf %268, %261 : vector<8x128xf32>
    %277 = arith.addf %259, %276 : vector<8x128xf32>
    %278 = math.tanh %277 : vector<8x128xf32>
    %279 = arith.subf %245, %278 : vector<8x128xf32>
    %280 = arith.mulf %275, %279 : vector<8x128xf32>
    %281 = arith.addf %278, %280 : vector<8x128xf32>
    %282 = arith.addi %29, %32 : i32
    %c6_i32 = arith.constant 6 : i32
    %283 = arith.addi %282, %c6_i32 : i32
    %284 = vector.broadcast %283 : i32 to vector<8x128xi32>
    %285 = arith.cmpi slt, %284, %28 : vector<8x128xi32>
    %cst_31 = arith.constant 0.000000e+00 : f32
    %286 = vector.broadcast %cst_31 : f32 to vector<8x128xf32>
    %287 = arith.select %285, %281, %286 : vector<8x128xi1>, vector<8x128xf32>
    %288 = vector.extract_strided_slice %35 {offsets = [7, 0, 0], sizes = [1, 8, 128], strides = [1, 1, 1]} : vector<8x8x128xf32> to vector<1x8x128xf32>
    %289 = vector.shape_cast %288 : vector<1x8x128xf32> to vector<8x128xf32>
    %290 = arith.mulf %4, %289 : vector<8x128xf32>
    %291 = arith.addf %290, %18 : vector<8x128xf32>
    %292 = arith.mulf %6, %289 : vector<8x128xf32>
    %293 = arith.addf %292, %22 : vector<8x128xf32>
    %294 = arith.mulf %8, %289 : vector<8x128xf32>
    %295 = arith.addf %294, %24 : vector<8x128xf32>
    %296 = arith.mulf %14, %281 : vector<8x128xf32>
    %297 = arith.addf %296, %26 : vector<8x128xf32>
    %298 = arith.mulf %10, %281 : vector<8x128xf32>
    %299 = arith.addf %298, %291 : vector<8x128xf32>
    %300 = arith.negf %299 : vector<8x128xf32>
    %301 = math.exp %300 : vector<8x128xf32>
    %cst_32 = arith.constant 1.000000e+00 : f32
    %302 = vector.broadcast %cst_32 : f32 to vector<8x128xf32>
    %303 = arith.addf %302, %301 : vector<8x128xf32>
    %304 = arith.divf %302, %303 : vector<8x128xf32>
    %305 = arith.mulf %12, %281 : vector<8x128xf32>
    %306 = arith.addf %305, %293 : vector<8x128xf32>
    %307 = arith.negf %306 : vector<8x128xf32>
    %308 = math.exp %307 : vector<8x128xf32>
    %cst_33 = arith.constant 1.000000e+00 : f32
    %309 = vector.broadcast %cst_33 : f32 to vector<8x128xf32>
    %310 = arith.addf %309, %308 : vector<8x128xf32>
    %311 = arith.divf %309, %310 : vector<8x128xf32>
    %312 = arith.mulf %304, %297 : vector<8x128xf32>
    %313 = arith.addf %295, %312 : vector<8x128xf32>
    %314 = math.tanh %313 : vector<8x128xf32>
    %315 = arith.subf %281, %314 : vector<8x128xf32>
    %316 = arith.mulf %311, %315 : vector<8x128xf32>
    %317 = arith.addf %314, %316 : vector<8x128xf32>
    %318 = arith.addi %29, %32 : i32
    %c7_i32 = arith.constant 7 : i32
    %319 = arith.addi %318, %c7_i32 : i32
    %320 = vector.broadcast %319 : i32 to vector<8x128xi32>
    %321 = arith.cmpi slt, %320, %28 : vector<8x128xi32>
    %cst_34 = arith.constant 0.000000e+00 : f32
    %322 = vector.broadcast %cst_34 : f32 to vector<8x128xf32>
    %323 = arith.select %321, %317, %322 : vector<8x128xi1>, vector<8x128xf32>
    %324 = vector.shape_cast %71 : vector<8x128xf32> to vector<1x8x128xf32>
    %325 = vector.shape_cast %107 : vector<8x128xf32> to vector<1x8x128xf32>
    %326 = vector.shape_cast %143 : vector<8x128xf32> to vector<1x8x128xf32>
    %327 = vector.shape_cast %179 : vector<8x128xf32> to vector<1x8x128xf32>
    %328 = vector.shape_cast %215 : vector<8x128xf32> to vector<1x8x128xf32>
    %329 = vector.shape_cast %251 : vector<8x128xf32> to vector<1x8x128xf32>
    %330 = vector.shape_cast %287 : vector<8x128xf32> to vector<1x8x128xf32>
    %331 = vector.shape_cast %323 : vector<8x128xf32> to vector<1x8x128xf32>
    %332 = tpu.concatenate %324, %325, %326, %327, %328, %329, %330, %331 in 0 : vector<1x8x128xf32>, vector<1x8x128xf32>, vector<1x8x128xf32>, vector<1x8x128xf32>, vector<1x8x128xf32>, vector<1x8x128xf32>, vector<1x8x128xf32>, vector<1x8x128xf32> -> vector<8x8x128xf32>
    %c0_35 = arith.constant 0 : index
    %333 = arith.index_cast %32 : i32 to index
    %c0_36 = arith.constant 0 : index
    %c0_37 = arith.constant 0 : index
    %334 = vector.load %arg5[%c0_35, %333, %c0_36, %c0_37] : memref<1x8x8x128xf32, #tpu.memory_space<vmem>>, vector<1x8x8x128xf32>
    %335 = vector.shape_cast %334 : vector<1x8x8x128xf32> to vector<8x8x128xf32>
    %336 = vector.shape_cast %332 : vector<8x8x128xf32> to vector<1x8x8x128xf32>
    tpu.vector_store %arg5[%c0_35, %333, %c0_36, %c0_37], %336 {strides = array<i32>} : memref<1x8x8x128xf32, #tpu.memory_space<vmem>>, vector<1x8x8x128xf32>,
    %c1_i32_38 = arith.constant 1 : i32
    %c0_39 = arith.constant 0 : index
    %c0_40 = arith.constant 0 : index
    %337 = vector.load %arg6[%c0_39, %c0_40] : memref<8x128xf32, #tpu.memory_space<vmem>>, vector<8x128xf32>
    tpu.vector_store %arg6[%c0_39, %c0_40], %317 {strides = array<i32>} : memref<8x128xf32, #tpu.memory_space<vmem>>, vector<8x128xf32>,
    return
  }
  func.func @transform_0(%arg0: i32, %arg1: i32) -> i32 {
    %c0_i32 = arith.constant 0 : i32
    %c0_i32_0 = arith.constant 0 : i32
    return %c0_i32 : i32
  }
  func.func @transform_1(%arg0: i32, %arg1: i32) -> (i32, i32, i32) {
    %c0_i32 = arith.constant 0 : i32
    %c0_i32_0 = arith.constant 0 : i32
    %c0_i32_1 = arith.constant 0 : i32
    return %arg0, %c0_i32, %c0_i32_0 : i32, i32, i32
  }
  func.func @transform_2(%arg0: i32, %arg1: i32) -> (i32, i32, i32, i32) {
    %c0_i32 = arith.constant 0 : i32
    %c0_i32_0 = arith.constant 0 : i32
    %c0_i32_1 = arith.constant 0 : i32
    return %arg0, %arg1, %c0_i32, %c0_i32_0 : i32, i32, i32, i32
  }
  func.func @transform_3(%arg0: i32, %arg1: i32) -> (i32, i32, i32, i32) {
    %c0_i32 = arith.constant 0 : i32
    %c0_i32_0 = arith.constant 0 : i32
    %c0_i32_1 = arith.constant 0 : i32
    return %arg0, %arg1, %c0_i32, %c0_i32_0 : i32, i32, i32, i32
  }
}

</mosaic_0001>

<llo_original>
// kernel: tpu_custom_call.1
$region0: #{tpu_custom_call.1}
  #allocation0 [shape = 'u32[]', space=smem, size = 0x4, offset = 0x4, fixed_abs, tag = 'smem constant byte address 0x4 - core index']
  #allocation1 [shape = 'u32[144,128]{1,0:T(1,128)}', space=vmem, size = 0x12000, scoped, tag = 'internal scratch']
  #allocation2 [shape = 'f32[8,128]{1,0:T(8,128)}', space=vmem, size = 0x1000, scoped, tag = 'scratch operand']
  %s0 = inlined_call_operand.hbm [shape: f32[12], index: 0, kind: input, shape index: {}]
  %s1 = inlined_call_operand.hbm [shape: s32[1,8,128], index: 1, kind: input, shape index: {}]
  %s2 = inlined_call_operand.hbm [shape: f32[1,8,8,128], index: 2, kind: input, shape index: {}]
  %s3 = inlined_call_operand.hbm [shape: f32[1,8,8,128], index: 3, kind: output, shape index: {}]
  %s4 = sld [smem:[#allocation0]]
  $region38: #{tpu_custom_call.1} parent=0
    _
  %s6 = ssub.s32 1, %s4
  %s7 = scalar_select 0, %s6, %s4
  $region1: #{tpu_custom_call.1} parent=0
    #allocation3 [shape = 'u8[512]{0}', space=smem, size = 0x200, scoped, tag = 'input window, operand 0, single buffered']
    #allocation4 [shape = 's32[1]{0}', space=sflag, size = 0x4, scoped, tag = 'scoped memory for tpu_custom_call.1']
    #allocation5 [shape = 's32[1]{0}', space=sflag, size = 0x4, scoped, tag = 'scoped memory for tpu_custom_call.1']
    #allocation6 [shape = 's32[1]{0}', space=sflag, size = 0x4, scoped, tag = 'scoped memory for tpu_custom_call.1']
    #allocation7 [shape = 'u8[4096]{0}', space=vmem, size = 0x1000, scoped, tag = 'input window, operand 1, single buffered']
    #allocation8 [shape = 'u8[32768]{0}', space=vmem, size = 0x8000, scoped, tag = 'input window, operand 2, single buffered']
    #allocation9 [shape = 's32[1]{0}', space=sflag, size = 0x4, scoped, tag = 'scoped memory for tpu_custom_call.1']
    #allocation10 [shape = 'u8[32768]{0}', space=vmem, size = 0x8000, scoped, tag = 'output window, operand 0, single buffered']
    %8 = vsyncpa [#allocation6], 0
    %9 = vsyncpa [#allocation4], 0
    %10 = vsyncpa [#allocation9], 0
    %11 = vsyncpa [#allocation5], 0
    // Predicated region
    $region2: #{tpu_custom_call.1} parent=1 // pred_check
      _
    $region3: #{tpu_custom_call.1} parent=1 // pred_check_branch
      %13 = sbr.rel (0) target = $region5
    $region4: #{tpu_custom_call.1} parent=1 // pred_region
      %s15 = ssub.s32 16, 16
      %16 = vsyncadd [#allocation6], %s15
      %19 = dma.hbm_to_smem %s0, 16, [#allocation3], [#allocation6]
    $region5: #{tpu_custom_call.1} parent=1 // pred_fallthru
      _
    // Predicated region
    $region6: #{tpu_custom_call.1} parent=1 // pred_check
      _
    $region7: #{tpu_custom_call.1} parent=1 // pred_check_branch
      %21 = sbr.rel (0) target = $region9
    $region8: #{tpu_custom_call.1} parent=1 // pred_region
      %s23 = ssub.s32 128, 128
      %24 = vsyncadd [#allocation4], %s23
      %s26 = sshll.u32 [#allocation7], 4
      %s27 = int_to_ptr.vmem [resolvable:$true] %s26
      %29 = dma.hbm_to_vmem [thread:$0]  %s1, 128, %s27, [#allocation4]
    $region9: #{tpu_custom_call.1} parent=1 // pred_fallthru
      _
    // Predicated region
    $region10: #{tpu_custom_call.1} parent=1 // pred_check
      _
    $region11: #{tpu_custom_call.1} parent=1 // pred_check_branch
      %31 = sbr.rel (0) target = $region13
    $region12: #{tpu_custom_call.1} parent=1 // pred_region
      %s33 = ssub.s32 1024, 1024
      %34 = vsyncadd [#allocation9], %s33
      %s35 = sshll.u32 [#allocation8], 4
      %s36 = int_to_ptr.vmem [resolvable:$true] %s35
      %41 = dma.hbm_to_vmem [thread:$0]  %s2, 1024, %s36, [#allocation9], 128, 128, 8
    $region13: #{tpu_custom_call.1} parent=1 // pred_fallthru
      _
    // Predicated region
    $region14: #{tpu_custom_call.1} parent=1 // pred_check
      _
    $region15: #{tpu_custom_call.1} parent=1 // pred_check_branch
      %43 = sbr.rel (0) target = $region17
    $region16: #{tpu_custom_call.1} parent=1 // pred_region
      %44 = dma.done [#allocation6], 16
    $region17: #{tpu_custom_call.1} parent=1 // pred_fallthru
      _
    // Predicated region
    $region18: #{tpu_custom_call.1} parent=1 // pred_check
      _
    $region19: #{tpu_custom_call.1} parent=1 // pred_check_branch
      %46 = sbr.rel (0) target = $region21
    $region20: #{tpu_custom_call.1} parent=1 // pred_region
      %47 = dma.done [#allocation4], 128
    $region21: #{tpu_custom_call.1} parent=1 // pred_fallthru
      _
    // Predicated region
    $region22: #{tpu_custom_call.1} parent=1 // pred_check
      _
    $region23: #{tpu_custom_call.1} parent=1 // pred_check_branch
      %49 = sbr.rel (0) target = $region25
    $region24: #{tpu_custom_call.1} parent=1 // pred_region
      %50 = dma.done [#allocation9], 1024
    $region25: #{tpu_custom_call.1} parent=1 // pred_fallthru
      _
    %51 = sfence
    %p52 = scmp.eq.s32.totalorder 0, 0
    // Predicated region
    $region26: #{tpu_custom_call.1} parent=1 // pred_check
      %p53 = pneg %p52
    $region27: #{tpu_custom_call.1} parent=1 // pred_check_branch
      %55 = sbr.rel (%p53) target = $region29
    $region28: #{tpu_custom_call.1} parent=1 // pred_region
      %56 = vst [vmem:[#allocation2] sm:$0xff] 0.0
    $region29: #{tpu_custom_call.1} parent=1 // pred_fallthru
      _
    %s57 = sld [smem:[#allocation3]]
    %v58 = vstv %s57
    %s59 = sld [smem:[#allocation3 + $0x1]]
    %v60 = vstv %s59
    %s61 = sld [smem:[#allocation3 + $0x2]]
    %v62 = vstv %s61
    %s63 = sld [smem:[#allocation3 + $0x3]]
    %v64 = vstv %s63
    %s65 = sld [smem:[#allocation3 + $0x4]]
    %v66 = vstv %s65
    %s67 = sld [smem:[#allocation3 + $0x5]]
    %v68 = vstv %s67
    %s69 = sld [smem:[#allocation3 + $0x6]]
    %s70 = sld [smem:[#allocation3 + $0x9]]
    %s71 = sadd.f32 %s69, %s70
    %v72 = vstv %s71
    %s73 = sld [smem:[#allocation3 + $0x7]]
    %s74 = sld [smem:[#allocation3 + $0xa]]
    %s75 = sadd.f32 %s73, %s74
    %v76 = vstv %s75
    %s77 = sld [smem:[#allocation3 + $0x8]]
    %v78 = vstv %s77
    %s79 = sld [smem:[#allocation3 + $0xb]]
    %v80 = vstv %s79
    %v81 = vld [vmem:[#allocation7] sm:$0xff]
    %s82 = smul.u32 0, 8
    %v83 = vld [vmem:[#allocation2] sm:$0xff]
    %s84 = smul.u32 0, 8
    %s85 = scalar_lea.vmem [#allocation8], %s84
    %v86 = vld [vmem:[%s85] sm:$0xff]
    %v87 = vld [vmem:[%s85 + $0x8] sm:$0xff]
    %v88 = vld [vmem:[%s85 + $0x10] sm:$0xff]
    %v89 = vld [vmem:[%s85 + $0x18] sm:$0xff]
    %v90 = vld [vmem:[%s85 + $0x20] sm:$0xff]
    %v91 = vld [vmem:[%s85 + $0x28] sm:$0xff]
    %v92 = vld [vmem:[%s85 + $0x30] sm:$0xff]
    %v93 = vld [vmem:[%s85 + $0x38] sm:$0xff]
    %v94 = vmul.f32 %v58, %v86
    %v95 = vadd.f32 %v94, %v72
    %v96 = vmul.f32 %v60, %v86
    %v97 = vadd.f32 %v96, %v76
    %v98 = vmul.f32 %v62, %v86
    %v99 = vadd.f32 %v98, %v78
    %v100 = vmul.f32 %v68, %v83
    %v101 = vadd.f32 %v100, %v80
    %v102 = vmul.f32 %v64, %v83
    %v103 = vadd.f32 %v102, %v95
    %v104 = vxor.u32 %v103, 2147483648
    %v105 = vmul.f32 %v104, 1.442695
    %v106 = vpow.pop %v105
    %v107 = vadd.f32 %v106, 1.0
    %v108 = vrcp.pop %v107
    %v109 = vmul.f32 1.0, %v108
    %v110 = vmul.f32 %v66, %v83
    %v111 = vadd.f32 %v110, %v97
    %v112 = vxor.u32 %v111, 2147483648
    %v113 = vmul.f32 %v112, 1.442695
    %v114 = vpow.pop %v113
    %v115 = vadd.f32 %v114, 1.0
    %v116 = vrcp.pop %v115
    %v117 = vmul.f32 1.0, %v116
    %v118 = vmul.f32 %v109, %v101
    %v119 = vadd.f32 %v99, %v118
    %v120 = vtanh.pop %v119
    %v121 = vsub.f32 %v83, %v120
    %v122 = vmul.f32 %v117, %v121
    %v123 = vadd.f32 %v120, %v122
    %s124 = sadd.s32 %s82, 0
    %v125 = vstv %s124
    %vm126 = vcmp.lt.s32.totalorder %v125, %v81
    %v127 = vsel %vm126, %v123, 0.0
    %v128 = vmul.f32 %v58, %v87
    %v129 = vadd.f32 %v128, %v72
    %v130 = vmul.f32 %v60, %v87
    %v131 = vadd.f32 %v130, %v76
    %v132 = vmul.f32 %v62, %v87
    %v133 = vadd.f32 %v132, %v78
    %v134 = vmul.f32 %v68, %v123
    %v135 = vadd.f32 %v134, %v80
    %v136 = vmul.f32 %v64, %v123
    %v137 = vadd.f32 %v136, %v129
    %v138 = vxor.u32 %v137, 2147483648
    %v139 = vmul.f32 %v138, 1.442695
    %v140 = vpow.pop %v139
    %v141 = vadd.f32 %v140, 1.0
    %v142 = vrcp.pop %v141
    %v143 = vmul.f32 1.0, %v142
    %v144 = vmul.f32 %v66, %v123
    %v145 = vadd.f32 %v144, %v131
    %v146 = vxor.u32 %v145, 2147483648
    %v147 = vmul.f32 %v146, 1.442695
    %v148 = vpow.pop %v147
    %v149 = vadd.f32 %v148, 1.0
    %v150 = vrcp.pop %v149
    %v151 = vmul.f32 1.0, %v150
    %v152 = vmul.f32 %v143, %v135
    %v153 = vadd.f32 %v133, %v152
    %v154 = vtanh.pop %v153
    %v155 = vsub.f32 %v123, %v154
    %v156 = vmul.f32 %v151, %v155
    %v157 = vadd.f32 %v154, %v156
    %s158 = sadd.s32 %s124, 1
    %v159 = vstv %s158
    %vm160 = vcmp.lt.s32.totalorder %v159, %v81
    %v161 = vsel %vm160, %v157, 0.0
    %v162 = vmul.f32 %v58, %v88
    %v163 = vadd.f32 %v162, %v72
    %v164 = vmul.f32 %v60, %v88
    %v165 = vadd.f32 %v164, %v76
    %v166 = vmul.f32 %v62, %v88
    %v167 = vadd.f32 %v166, %v78
    %v168 = vmul.f32 %v68, %v157
    %v169 = vadd.f32 %v168, %v80
    %v170 = vmul.f32 %v64, %v157
    %v171 = vadd.f32 %v170, %v163
    %v172 = vxor.u32 %v171, 2147483648
    %v173 = vmul.f32 %v172, 1.442695
    %v174 = vpow.pop %v173
    %v175 = vadd.f32 %v174, 1.0
    %v176 = vrcp.pop %v175
    %v177 = vmul.f32 1.0, %v176
    %v178 = vmul.f32 %v66, %v157
    %v179 = vadd.f32 %v178, %v165
    %v180 = vxor.u32 %v179, 2147483648
    %v181 = vmul.f32 %v180, 1.442695
    %v182 = vpow.pop %v181
    %v183 = vadd.f32 %v182, 1.0
    %v184 = vrcp.pop %v183
    %v185 = vmul.f32 1.0, %v184
    %v186 = vmul.f32 %v177, %v169
    %v187 = vadd.f32 %v167, %v186
    %v188 = vtanh.pop %v187
    %v189 = vsub.f32 %v157, %v188
    %v190 = vmul.f32 %v185, %v189
    %v191 = vadd.f32 %v188, %v190
    %s192 = sadd.s32 %s124, 2
    %v193 = vstv %s192
    %vm194 = vcmp.lt.s32.totalorder %v193, %v81
    %v195 = vsel %vm194, %v191, 0.0
    %v196 = vmul.f32 %v58, %v89
    %v197 = vadd.f32 %v196, %v72
    %v198 = vmul.f32 %v60, %v89
    %v199 = vadd.f32 %v198, %v76
    %v200 = vmul.f32 %v62, %v89
    %v201 = vadd.f32 %v200, %v78
    %v202 = vmul.f32 %v68, %v191
    %v203 = vadd.f32 %v202, %v80
    %v204 = vmul.f32 %v64, %v191
    %v205 = vadd.f32 %v204, %v197
    %v206 = vxor.u32 %v205, 2147483648
    %v207 = vmul.f32 %v206, 1.442695
    %v208 = vpow.pop %v207
    %v209 = vadd.f32 %v208, 1.0
    %v210 = vrcp.pop %v209
    %v211 = vmul.f32 1.0, %v210
    %v212 = vmul.f32 %v66, %v191
    %v213 = vadd.f32 %v212, %v199
    %v214 = vxor.u32 %v213, 2147483648
    %v215 = vmul.f32 %v214, 1.442695
    %v216 = vpow.pop %v215
    %v217 = vadd.f32 %v216, 1.0
    %v218 = vrcp.pop %v217
    %v219 = vmul.f32 1.0, %v218
    %v220 = vmul.f32 %v211, %v203
    %v221 = vadd.f32 %v201, %v220
    %v222 = vtanh.pop %v221
    %v223 = vsub.f32 %v191, %v222
    %v224 = vmul.f32 %v219, %v223
    %v225 = vadd.f32 %v222, %v224
    %s226 = sadd.s32 %s124, 3
    %v227 = vstv %s226
    %vm228 = vcmp.lt.s32.totalorder %v227, %v81
    %v229 = vsel %vm228, %v225, 0.0
    %v230 = vmul.f32 %v58, %v90
    %v231 = vadd.f32 %v230, %v72
    %v232 = vmul.f32 %v60, %v90
    %v233 = vadd.f32 %v232, %v76
    %v234 = vmul.f32 %v62, %v90
    %v235 = vadd.f32 %v234, %v78
    %v236 = vmul.f32 %v68, %v225
    %v237 = vadd.f32 %v236, %v80
    %v238 = vmul.f32 %v64, %v225
    %v239 = vadd.f32 %v238, %v231
    %v240 = vxor.u32 %v239, 2147483648
    %v241 = vmul.f32 %v240, 1.442695
    %v242 = vpow.pop %v241
    %v243 = vadd.f32 %v242, 1.0
    %v244 = vrcp.pop %v243
    %v245 = vmul.f32 1.0, %v244
    %v246 = vmul.f32 %v66, %v225
    %v247 = vadd.f32 %v246, %v233
    %v248 = vxor.u32 %v247, 2147483648
    %v249 = vmul.f32 %v248, 1.442695
    %v250 = vpow.pop %v249
    %v251 = vadd.f32 %v250, 1.0
    %v252 = vrcp.pop %v251
    %v253 = vmul.f32 1.0, %v252
    %v254 = vmul.f32 %v245, %v237
    %v255 = vadd.f32 %v235, %v254
    %v256 = vtanh.pop %v255
    %v257 = vsub.f32 %v225, %v256
    %v258 = vmul.f32 %v253, %v257
    %v259 = vadd.f32 %v256, %v258
    %s260 = sadd.s32 %s124, 4
    %v261 = vstv %s260
    %vm262 = vcmp.lt.s32.totalorder %v261, %v81
    %v263 = vsel %vm262, %v259, 0.0
    %v264 = vmul.f32 %v58, %v91
    %v265 = vadd.f32 %v264, %v72
    %v266 = vmul.f32 %v60, %v91
    %v267 = vadd.f32 %v266, %v76
    %v268 = vmul.f32 %v62, %v91
    %v269 = vadd.f32 %v268, %v78
    %v270 = vmul.f32 %v68, %v259
    %v271 = vadd.f32 %v270, %v80
    %v272 = vmul.f32 %v64, %v259
    %v273 = vadd.f32 %v272, %v265
    %v274 = vxor.u32 %v273, 2147483648
    %v275 = vmul.f32 %v274, 1.442695
    %v276 = vpow.pop %v275
    %v277 = vadd.f32 %v276, 1.0
    %v278 = vrcp.pop %v277
    %v279 = vmul.f32 1.0, %v278
    %v280 = vmul.f32 %v66, %v259
    %v281 = vadd.f32 %v280, %v267
    %v282 = vxor.u32 %v281, 2147483648
    %v283 = vmul.f32 %v282, 1.442695
    %v284 = vpow.pop %v283
    %v285 = vadd.f32 %v284, 1.0
    %v286 = vrcp.pop %v285
    %v287 = vmul.f32 1.0, %v286
    %v288 = vmul.f32 %v279, %v271
    %v289 = vadd.f32 %v269, %v288
    %v290 = vtanh.pop %v289
    %v291 = vsub.f32 %v259, %v290
    %v292 = vmul.f32 %v287, %v291
    %v293 = vadd.f32 %v290, %v292
    %s294 = sadd.s32 %s124, 5
    %v295 = vstv %s294
    %vm296 = vcmp.lt.s32.totalorder %v295, %v81
    %v297 = vsel %vm296, %v293, 0.0
    %v298 = vmul.f32 %v58, %v92
    %v299 = vadd.f32 %v298, %v72
    %v300 = vmul.f32 %v60, %v92
    %v301 = vadd.f32 %v300, %v76
    %v302 = vmul.f32 %v62, %v92
    %v303 = vadd.f32 %v302, %v78
    %v304 = vmul.f32 %v68, %v293
    %v305 = vadd.f32 %v304, %v80
    %v306 = vmul.f32 %v64, %v293
    %v307 = vadd.f32 %v306, %v299
    %v308 = vxor.u32 %v307, 2147483648
    %v309 = vmul.f32 %v308, 1.442695
    %v310 = vpow.pop %v309
    %v311 = vadd.f32 %v310, 1.0
    %v312 = vrcp.pop %v311
    %v313 = vmul.f32 1.0, %v312
    %v314 = vmul.f32 %v66, %v293
    %v315 = vadd.f32 %v314, %v301
    %v316 = vxor.u32 %v315, 2147483648
    %v317 = vmul.f32 %v316, 1.442695
    %v318 = vpow.pop %v317
    %v319 = vadd.f32 %v318, 1.0
    %v320 = vrcp.pop %v319
    %v321 = vmul.f32 1.0, %v320
    %v322 = vmul.f32 %v313, %v305
    %v323 = vadd.f32 %v303, %v322
    %v324 = vtanh.pop %v323
    %v325 = vsub.f32 %v293, %v324
    %v326 = vmul.f32 %v321, %v325
    %v327 = vadd.f32 %v324, %v326
    %s328 = sadd.s32 %s124, 6
    %v329 = vstv %s328
    %vm330 = vcmp.lt.s32.totalorder %v329, %v81
    %v331 = vsel %vm330, %v327, 0.0
    %v332 = vmul.f32 %v58, %v93
    %v333 = vadd.f32 %v332, %v72
    %v334 = vmul.f32 %v60, %v93
    %v335 = vadd.f32 %v334, %v76
    %v336 = vmul.f32 %v62, %v93
    %v337 = vadd.f32 %v336, %v78
    %v338 = vmul.f32 %v68, %v327
    %v339 = vadd.f32 %v338, %v80
    %v340 = vmul.f32 %v64, %v327
    %v341 = vadd.f32 %v340, %v333
    %v342 = vxor.u32 %v341, 2147483648
    %v343 = vmul.f32 %v342, 1.442695
    %v344 = vpow.pop %v343
    %v345 = vadd.f32 %v344, 1.0
    %v346 = vrcp.pop %v345
    %v347 = vmul.f32 1.0, %v346
    %v348 = vmul.f32 %v66, %v327
    %v349 = vadd.f32 %v348, %v335
    %v350 = vxor.u32 %v349, 2147483648
    %v351 = vmul.f32 %v350, 1.442695
    %v352 = vpow.pop %v351
    %v353 = vadd.f32 %v352, 1.0
    %v354 = vrcp.pop %v353
    %v355 = vmul.f32 1.0, %v354
    %v356 = vmul.f32 %v347, %v339
    %v357 = vadd.f32 %v337, %v356
    %v358 = vtanh.pop %v357
    %v359 = vsub.f32 %v327, %v358
    %v360 = vmul.f32 %v355, %v359
    %v361 = vadd.f32 %v358, %v360
    %s362 = sadd.s32 %s124, 7
    %v363 = vstv %s362
    %vm364 = vcmp.lt.s32.totalorder %v363, %v81
    %v365 = vsel %vm364, %v361, 0.0
    %s366 = scalar_lea.vmem [#allocation10], %s84
    %367 = vst [vmem:[%s366] sm:$0xff] %v127
    %368 = vst [vmem:[%s366 + $0x8] sm:$0xff] %v161
    %369 = vst [vmem:[%s366 + $0x10] sm:$0xff] %v195
    %370 = vst [vmem:[%s366 + $0x18] sm:$0xff] %v229
    %371 = vst [vmem:[%s366 + $0x20] sm:$0xff] %v263
    %372 = vst [vmem:[%s366 + $0x28] sm:$0xff] %v297
    %373 = vst [vmem:[%s366 + $0x30] sm:$0xff] %v331
    %374 = vst [vmem:[%s366 + $0x38] sm:$0xff] %v365
    %375 = vst [vmem:[#allocation2] sm:$0xff] %v361
    // Predicated region
    $region30: #{tpu_custom_call.1} parent=1 // pred_check
      _
    $region31: #{tpu_custom_call.1} parent=1 // pred_check_branch
      %377 = sbr.rel (0) target = $region33
    $region32: #{tpu_custom_call.1} parent=1 // pred_region
      %s379 = ssub.s32 1024, 1024
      %380 = vsyncadd [#allocation5], %s379
      %s381 = sshll.u32 [#allocation10], 4
      %s382 = int_to_ptr.vmem [resolvable:$true] %s381
      %387 = dma.vmem_to_hbm [thread:$0]  %s382, 1024, %s3, [#allocation5], 128, 128, 8
    $region33: #{tpu_custom_call.1} parent=1 // pred_fallthru
      _
    // Predicated region
    $region34: #{tpu_custom_call.1} parent=1 // pred_check
      _
    $region35: #{tpu_custom_call.1} parent=1 // pred_check_branch
      %389 = sbr.rel (0) target = $region37
    $region36: #{tpu_custom_call.1} parent=1 // pred_region
      %390 = dma.done [#allocation5], 1024
    $region37: #{tpu_custom_call.1} parent=1 // pred_fallthru
      _
    %391 = vsyncpa [#allocation4], 1
    %392 = vsyncpa [#allocation9], 1
    %393 = vsyncpa [#allocation5], 1
    %394 = vsyncpa [#allocation6], 1

</llo_original>
